<compile_context>
chip_gen: v5e
topology: v5e:2x2
jax: 0.10.0
libtpu: 0.0.40
codegen_flags: <defaults>
</compile_context>

<pallas_src>
from typing import NamedTuple

import jax
import jax.numpy as jnp
from jax import lax
from jax.experimental import pallas as pl
from jax.experimental.pallas import tpu as pltpu

_LANES = 128


def _round_up(x, m):
    return ((x + m - 1) // m) * m


# ----------------------------------------------------------------------------
# Fused kernel: joint projection -> spatial attention -> classification for
# both (obj, sub) branches of a block of `bn` images per grid step.
# ----------------------------------------------------------------------------
def _make_rel_kernel(bn, hw_valid, hw_pad, compute_dtype):
    """Builds the kernel body for one grid step (a block of `bn` images).

    Ref shapes seen by the kernel:
      qin_ref : (2*bn, 3*wvec) packed [word_obj|rel|0] / [0|rel|word_sub] rows,
                interleaved (row 2i = obj of image i, row 2i+1 = sub).
      f_ref   : (bn, C, HWp)   conv features, NCHW flattened, HW zero-padded
                to a multiple of 128 lanes.
      wj_ref  : (3*wvec, tv)   [W_obj; W_rel; W_sub]   (shared, VMEM resident)
      wv_ref  : (tv, A)
      wft_ref : (A, C)         W_f^T
      wc_ref  : (C, K)         classifier, K padded to 128 lanes
      y_ref   : (2*bn, K)      logits, interleaved rows, lane/sublane dense
    """
    need_mask = hw_valid != hw_pad
    cdt = compute_dtype

    def kernel(qin_ref, f_ref, wj_ref, wv_ref, wft_ref, wc_ref, y_ref):
        # ---- weight-side matmuls: all images & branches collapsed to M=2*bn --
        v = jnp.tanh(jnp.dot(qin_ref[...], wj_ref[...],
                             preferred_element_type=jnp.float32))    # (2bn, tv)
        va = jnp.tanh(jnp.dot(v.astype(cdt), wv_ref[...],
                              preferred_element_type=jnp.float32))   # (2bn, A)
        # Fold W_f into the query side:  logits = (va @ W_f^T) @ f.
        q = jnp.dot(va.astype(cdt), wft_ref[...],
                    preferred_element_type=jnp.float32).astype(cdt)  # (2bn, C)

        # ---- per-image attention over spatial positions (f never transposed) -
        feats = []
        for i in range(bn):                        # static unroll, bn is small
            f_i = f_ref[i]                         # (C, HWp), natural layout
            q_i = q[2 * i:2 * i + 2, :]            # (2, C): obj row, sub row
            s = jnp.dot(q_i, f_i,
                        preferred_element_type=jnp.float32)          # (2, HWp)
            if need_mask:
                col = lax.broadcasted_iota(jnp.int32, s.shape, 1)
                s = jnp.where(col < hw_valid, s, -1e30)
            m = jnp.max(s, axis=-1, keepdims=True)
            e = jnp.exp(s - m)
            att = (e / jnp.sum(e, axis=-1, keepdims=True)).astype(cdt)
            # feat^T = f @ att^T keeps the big operand un-transposed; only the
            # tiny (C, 2) result gets transposed back for the classifier.
            feat_t = lax.dot_general(f_i, att, (((1,), (1,)), ((), ())),
                                     preferred_element_type=jnp.float32)  # (C,2)
            feats.append(feat_t.T)                 # (2, C)

        feat = jnp.concatenate(feats, axis=0).astype(cdt)            # (2bn, C)
        # Single lane/sublane-dense store of the padded-K logits.
        y_ref[...] = jnp.dot(feat, wc_ref[...],
                             preferred_element_type=jnp.float32
                             ).astype(y_ref.dtype)                   # (2bn, K)

    return kernel


def fused_rel_call(qin, f_pad, w_j, w_v, w_ft, w_cls_pad, *, hw_valid,
                   block_images=None):
    two_n, kq = qin.shape
    n, c, hwp = f_pad.shape
    k = w_cls_pad.shape[-1]
    bn = n if block_images is None else block_images
    assert n % bn == 0, "batch must be divisible by the image-block size"
    assert (2 * bn) % 8 == 0 or bn == n, \
        "image block must give >=8 query rows (sublane tile) or cover the batch"

    kernel = _make_rel_kernel(bn, hw_valid, hwp, f_pad.dtype)
    wconst = lambda i: (0, 0)   # weights: constant block index -> VMEM resident

    return pl.pallas_call(
        kernel,
        out_shape=jax.ShapeDtypeStruct((two_n, k), jnp.float32),
        grid_spec=pltpu.PrefetchScalarGridSpec(
            num_scalar_prefetch=0,
            grid=(n // bn,),
            in_specs=[
                pl.BlockSpec((2 * bn, kq), lambda i: (i, 0)),
                pl.BlockSpec((bn, c, hwp), lambda i: (i, 0, 0)),
                pl.BlockSpec(w_j.shape, wconst),
                pl.BlockSpec(w_v.shape, wconst),
                pl.BlockSpec(w_ft.shape, wconst),
                pl.BlockSpec(w_cls_pad.shape, wconst),
            ],
            out_specs=pl.BlockSpec((2 * bn, k), lambda i: (i, 0)),
        ),
        compiler_params=pltpu.CompilerParams(
            dimension_semantics=("parallel",)),
    )(qin, f_pad, w_j, w_v, w_ft, w_cls_pad)


# ----------------------------------------------------------------------------
# Synthetic TaskModuleRel with the call interface RELController expects.
# mode='joint' returns lazy task descriptors; mode='rel' runs the fused kernel.
# ----------------------------------------------------------------------------
class _TaskVec(NamedTuple):
    """Lazy task-vector descriptor: carrying the raw embeddings lets the 'rel'
    call fuse the joint projection into the same Pallas kernel."""
    word: jax.Array         # (N, wvec)
    rel: jax.Array          # (N, wvec)
    use_sub_weight: bool    # True -> W_sub, False -> W_obj for this branch


class TaskModuleRel:
    def __init__(self, params, num_rel_classes, compute_dtype=jnp.bfloat16,
                 block_images=None):
        self.nc = num_rel_classes
        self.cdt = compute_dtype
        self.block_images = block_images
        self.wvec = params['W_obj'].shape[0]
        c = params['W_cls'].shape[0]
        k = _round_up(num_rel_classes, _LANES)

        # Cached, cast once (no per-call weight concats, no batch broadcast).
        self.w_j_os = jnp.concatenate(
            [params['W_obj'], params['W_rel'], params['W_sub']],
            axis=0).astype(compute_dtype)                       # (3*wvec, tv)
        self.w_j_oo = jnp.concatenate(
            [params['W_obj'], params['W_rel'], params['W_obj']],
            axis=0).astype(compute_dtype)                       # rel_sub=None
        self.w_v = params['W_v'].astype(compute_dtype)          # (tv, A)
        self.w_ft = jnp.transpose(params['W_f']).astype(compute_dtype)  # (A, C)
        # Zero-pad the classifier so the kernel's output store is lane-dense.
        self.w_cls_pad = jnp.concatenate(
            [params['W_cls'],
             jnp.zeros((c, k - num_rel_classes), params['W_cls'].dtype)],
            axis=1).astype(compute_dtype)                       # (C, 128)

    def __call__(self, f=None, rel_obj=None, rel_rel=None, rel_sub=None,
                 v_rel_obj=None, v_rel_sub=None, get_obj=False, get_sub=False,
                 mode='', step=0):
        if mode == 'joint':
            outs = []
            if get_obj:
                outs.append(_TaskVec(rel_obj, rel_rel, False))
            if get_sub:
                outs.append(_TaskVec(rel_sub, rel_rel, True))
            return tuple(outs)
        elif mode == 'rel':
            d_o, d_s = v_rel_obj, v_rel_sub
            n, c = f.shape[0], f.shape[1]
            hw = f.shape[2] * f.shape[3]
            hwp = _round_up(hw, _LANES)
            f3 = f.reshape(n, c, hw)              # NCHW -> (N, C, HW); free
            if hwp != hw:
                f3 = jnp.pad(f3, ((0, 0), (0, 0), (0, hwp - hw)))
            f3 = f3.astype(self.cdt)

            # Pack query rows interleaved: row 2i = [word_obj|rel|0],
            # row 2i+1 = [0|rel|word_sub] against [W_obj; W_rel; W_sub].
            z = jnp.zeros_like(d_o.word)
            row_obj = jnp.concatenate([d_o.word, d_o.rel, z], axis=-1)
            row_sub = jnp.concatenate([z, d_s.rel, d_s.word], axis=-1)
            qin = jnp.stack([row_obj, row_sub], axis=1).reshape(
                2 * n, 3 * self.wvec).astype(self.cdt)
            w_j = self.w_j_os if d_s.use_sub_weight else self.w_j_oo

            y = fused_rel_call(qin, f3, w_j, self.w_v, self.w_ft,
                               self.w_cls_pad, hw_valid=hw,
                               block_images=self.block_images)   # (2N, 128)
            y3 = y.reshape(n, 2, -1)
            return y3[:, 0, :self.nc], y3[:, 1, :self.nc]
        else:
            raise ValueError(f"unknown mode {mode!r}")


# ----------------------------------------------------------------------------
# RELController — exact port of the PyTorch forward control flow.
# ----------------------------------------------------------------------------
class RELController:
    def __init__(self, task_v_size, att_dim, num_rel_classes):
        self.name = 'RELController'
        self.task_v_size = task_v_size
        self.att_dim = att_dim
        self.num_rel_classes = num_rel_classes

    def forward(self, X_rel=None, rel_obj=None, rel_rel=None, rel_sub=None,
                wvecs=None, q_vec=None, ml=None, X_loc=None, mode='', step=0):
        if mode == 'execute':
            if rel_sub is None:
                v_rel_input = ml['TaskModuleRel'](f=X_rel, rel_obj=rel_obj,
                                                  rel_rel=rel_rel,
                                                  get_obj=True, mode='joint')
                y_rel_obj, y_rel_sub = ml['TaskModuleRel'](
                    f=X_rel, v_rel_obj=v_rel_input[0],
                    v_rel_sub=v_rel_input[0], mode='rel')
            else:
                v_rels = ml['TaskModuleRel'](f=X_rel, rel_obj=rel_obj,
                                             rel_rel=rel_rel, rel_sub=rel_sub,
                                             get_obj=True, get_sub=True,
                                             mode='joint', step=step)
                v_rel_obj, v_rel_sub = v_rels
                y_rel_obj, y_rel_sub = ml['TaskModuleRel'](
                    f=X_rel, v_rel_obj=v_rel_obj, v_rel_sub=v_rel_sub,
                    mode='rel')
            rel_output = [y_rel_obj, y_rel_sub]
            return rel_output


# ----------------------------------------------------------------------------
# Pure-JAX reference (unfused f32 math).
# ----------------------------------------------------------------------------
def _reference_forward(X_rel, rel_obj, rel_rel, rel_sub, params):
    N, C = X_rel.shape[0], X_rel.shape[1]
    f = jnp.transpose(X_rel.reshape(N, C, -1), (0, 2, 1))      # (N, HW, C)

    def joint(w, key):
        return jnp.tanh(w @ params[key] + rel_rel @ params['W_rel'])

    v_obj = joint(rel_obj, 'W_obj')
    v_sub = joint(rel_sub, 'W_sub') if rel_sub is not None else v_obj

    def branch(v):
        va = jnp.tanh(v @ params['W_v'])                       # (N, A)
        fa = jnp.einsum('nhc,ca->nha', f, params['W_f'])       # (N, HW, A)
        logits = jnp.einsum('nha,na->nh', fa, va)              # (N, HW)
        att = jax.nn.softmax(logits, axis=-1)
        feat = jnp.einsum('nh,nhc->nc', att, f)                # (N, C)
        return feat @ params['W_cls']                          # (N, nc)

    return branch(v_obj), branch(v_sub)


# ----------------------------------------------------------------------------
# Driver
# ----------------------------------------------------------------------------
if __name__ == "__main__":
    N, C, H, W = 8, 32, 8, 8          # X_rel: NCHW conv features (HW=64 -> padded to 128)
    wvec_dim = 32
    task_v_size = 32
    att_dim = 32
    num_rel_classes = 16
    BLOCK_IMAGES = 4                   # grid = (2,), 8 query rows per step

    key = jax.random.PRNGKey(0)
    ks = jax.random.split(key, 10)

    X_rel = jax.random.normal(ks[0], (N, C, H, W), dtype=jnp.float32)
    rel_obj = jax.random.normal(ks[1], (N, wvec_dim), dtype=jnp.float32)
    rel_rel = jax.random.normal(ks[2], (N, wvec_dim), dtype=jnp.float32)
    rel_sub = jax.random.normal(ks[3], (N, wvec_dim), dtype=jnp.float32)

    params = {
        'W_obj': 0.1 * jax.random.normal(ks[4], (wvec_dim, task_v_size), jnp.float32),
        'W_rel': 0.1 * jax.random.normal(ks[5], (wvec_dim, task_v_size), jnp.float32),
        'W_sub': 0.1 * jax.random.normal(ks[6], (wvec_dim, task_v_size), jnp.float32),
        'W_v':   0.1 * jax.random.normal(ks[7], (task_v_size, att_dim), jnp.float32),
        'W_f':   0.1 * jax.random.normal(ks[8], (C, att_dim), jnp.float32),
        'W_cls': 0.1 * jax.random.normal(ks[9], (C, num_rel_classes), jnp.float32),
    }

    controller = RELController(task_v_size, att_dim, num_rel_classes)

    r_obj, r_sub = _reference_forward(X_rel, rel_obj, rel_rel, rel_sub, params)
    r_obj0, r_sub0 = _reference_forward(X_rel, rel_obj, rel_rel, None, params)

    # ---- f32 compute path: tight numerical check of the fused math. --------
    ml32 = {'TaskModuleRel': TaskModuleRel(params, num_rel_classes,
                                           compute_dtype=jnp.float32,
                                           block_images=BLOCK_IMAGES)}
    y_obj, y_sub = controller.forward(X_rel=X_rel, rel_obj=rel_obj,
                                      rel_rel=rel_rel, rel_sub=rel_sub,
                                      ml=ml32, mode='execute', step=0)
    y_obj0, y_sub0 = controller.forward(X_rel=X_rel, rel_obj=rel_obj,
                                        rel_rel=rel_rel, rel_sub=None,
                                        ml=ml32, mode='execute', step=0)
    jax.block_until_ready((y_obj, y_sub, y_obj0, y_sub0))
    assert y_obj.shape == (N, num_rel_classes)
    assert y_sub.shape == (N, num_rel_classes)
    assert jnp.allclose(y_obj, r_obj, rtol=5e-3, atol=5e-3)
    assert jnp.allclose(y_sub, r_sub, rtol=5e-3, atol=5e-3)
    assert jnp.allclose(y_obj0, r_obj0, rtol=5e-3, atol=5e-3)
    assert jnp.allclose(y_sub0, r_sub0, rtol=5e-3, atol=5e-3)

    # ---- bf16 compute path (MXU-native on v5e/v6e/v7x): looser tolerance. --
    mlbf = {'TaskModuleRel': TaskModuleRel(params, num_rel_classes,
                                           compute_dtype=jnp.bfloat16,
                                           block_images=BLOCK_IMAGES)}
    b_obj, b_sub = controller.forward(X_rel=X_rel, rel_obj=rel_obj,
                                      rel_rel=rel_rel, rel_sub=rel_sub,
                                      ml=mlbf, mode='execute', step=0)
    b_obj0, b_sub0 = controller.forward(X_rel=X_rel, rel_obj=rel_obj,
                                        rel_rel=rel_rel, rel_sub=None,
                                        ml=mlbf, mode='execute', step=0)
    jax.block_until_ready((b_obj, b_sub, b_obj0, b_sub0))
    assert jnp.allclose(b_obj, r_obj, rtol=1e-1, atol=1e-1)
    assert jnp.allclose(b_sub, r_sub, rtol=1e-1, atol=1e-1)
    assert jnp.allclose(b_obj0, r_obj0, rtol=1e-1, atol=1e-1)
    assert jnp.allclose(b_sub0, r_sub0, rtol=1e-1, atol=1e-1)

    print("KERNEL_OK")
</pallas_src>

<mosaic_0001>
module attributes {stable_mosaic.version = 11 : i64} {
  func.func @kernel(%arg0: i32, %arg1: memref<8x96xf32, #tpu.memory_space<vmem>>, %arg2: memref<4x32x128xf32, #tpu.memory_space<vmem>>, %arg3: memref<96x32xf32, #tpu.memory_space<vmem>>, %arg4: memref<32x32xf32, #tpu.memory_space<vmem>>, %arg5: memref<32x32xf32, #tpu.memory_space<vmem>>, %arg6: memref<32x128xf32, #tpu.memory_space<vmem>>, %arg7: memref<8x128xf32, #tpu.memory_space<vmem>>) attributes {dimension_semantics = [#tpu.dimension_semantics<parallel>], iteration_bounds = array<i64: 2>, scalar_prefetch = 0 : i64, scratch_operands = 0 : i64, tpu.core_type = #tpu.core_type<tc>, window_params = [{transform_indices = @transform_0, window_bounds = array<i64: 8, 96>}, {transform_indices = @transform_1, window_bounds = array<i64: 4, 32, 128>}, {pipeline_mode = #tpu.pipeline_mode<synchronous>, transform_indices = @transform_2, window_bounds = array<i64: 96, 32>}, {pipeline_mode = #tpu.pipeline_mode<synchronous>, transform_indices = @transform_3, window_bounds = array<i64: 32, 32>}, {pipeline_mode = #tpu.pipeline_mode<synchronous>, transform_indices = @transform_4, window_bounds = array<i64: 32, 32>}, {pipeline_mode = #tpu.pipeline_mode<synchronous>, transform_indices = @transform_5, window_bounds = array<i64: 32, 128>}, {transform_indices = @transform_6, window_bounds = array<i64: 8, 128>}]} {
    %c0 = arith.constant 0 : index
    %c0_0 = arith.constant 0 : index
    %0 = vector.load %arg1[%c0, %c0_0] : memref<8x96xf32, #tpu.memory_space<vmem>>, vector<8x96xf32>
    %c0_1 = arith.constant 0 : index
    %c0_2 = arith.constant 0 : index
    %1 = vector.load %arg3[%c0_1, %c0_2] : memref<96x32xf32, #tpu.memory_space<vmem>>, vector<96x32xf32>
    %cst = arith.constant dense<0.000000e+00> : vector<8x32xf32>
    %2 = tpu.matmul %0, %1, %cst {dimension_numbers = #tpu.dot_dimension_numbers<[1], [0], [0], [1], [0, 0, 1, 1], [], []>} : vector<8x96xf32>, vector<96x32xf32>, vector<8x32xf32> -> vector<8x32xf32>
    %3 = math.tanh %2 : vector<8x32xf32>
    %c0_3 = arith.constant 0 : index
    %c0_4 = arith.constant 0 : index
    %4 = vector.load %arg4[%c0_3, %c0_4] : memref<32x32xf32, #tpu.memory_space<vmem>>, vector<32x32xf32>
    %cst_5 = arith.constant dense<0.000000e+00> : vector<8x32xf32>
    %5 = tpu.matmul %3, %4, %cst_5 {dimension_numbers = #tpu.dot_dimension_numbers<[1], [0], [0], [1], [0, 0, 1, 1], [], []>} : vector<8x32xf32>, vector<32x32xf32>, vector<8x32xf32> -> vector<8x32xf32>
    %6 = math.tanh %5 : vector<8x32xf32>
    %c0_6 = arith.constant 0 : index
    %c0_7 = arith.constant 0 : index
    %7 = vector.load %arg5[%c0_6, %c0_7] : memref<32x32xf32, #tpu.memory_space<vmem>>, vector<32x32xf32>
    %cst_8 = arith.constant dense<0.000000e+00> : vector<8x32xf32>
    %8 = tpu.matmul %6, %7, %cst_8 {dimension_numbers = #tpu.dot_dimension_numbers<[1], [0], [0], [1], [0, 0, 1, 1], [], []>} : vector<8x32xf32>, vector<32x32xf32>, vector<8x32xf32> -> vector<8x32xf32>
    %c0_9 = arith.constant 0 : index
    %c0_10 = arith.constant 0 : index
    %c0_11 = arith.constant 0 : index
    %9 = vector.load %arg2[%c0_9, %c0_10, %c0_11] : memref<4x32x128xf32, #tpu.memory_space<vmem>>, vector<1x32x128xf32>
    %10 = vector.shape_cast %9 : vector<1x32x128xf32> to vector<32x128xf32>
    %11 = vector.extract_strided_slice %8 {offsets = [0, 0], sizes = [2, 32], strides = [1, 1]} : vector<8x32xf32> to vector<2x32xf32>
    %cst_12 = arith.constant dense<0.000000e+00> : vector<2x128xf32>
    %12 = tpu.matmul %11, %10, %cst_12 {dimension_numbers = #tpu.dot_dimension_numbers<[1], [0], [0], [1], [0, 0, 1, 1], [], []>} : vector<2x32xf32>, vector<32x128xf32>, vector<2x128xf32> -> vector<2x128xf32>
    %13 = tpu.iota {dimensions = array<i32: 1>} : vector<2x128xi32>
    %c64_i32 = arith.constant 64 : i32
    %14 = vector.broadcast %c64_i32 : i32 to vector<2x128xi32>
    %15 = arith.cmpi slt, %13, %14 : vector<2x128xi32>
    %cst_13 = arith.constant -1.000000e+30 : f32
    %16 = vector.broadcast %cst_13 : f32 to vector<2x128xf32>
    %17 = arith.select %15, %12, %16 : vector<2x128xi1>, vector<2x128xf32>
    %cst_14 = arith.constant dense<0xFF800000> : vector<2xf32>
    %18 = vector.multi_reduction <maximumf>, %17, %cst_14 [1] : vector<2x128xf32> to vector<2xf32>
    %19 = vector.shape_cast %18 : vector<2xf32> to vector<2x1xf32>
    %20 = vector.broadcast %19 : vector<2x1xf32> to vector<2x128xf32>
    %21 = arith.subf %17, %20 : vector<2x128xf32>
    %22 = math.exp %21 : vector<2x128xf32>
    %cst_15 = arith.constant dense<0.000000e+00> : vector<2xf32>
    %23 = vector.multi_reduction <add>, %22, %cst_15 [1] : vector<2x128xf32> to vector<2xf32>
    %24 = vector.shape_cast %23 : vector<2xf32> to vector<2x1xf32>
    %25 = vector.broadcast %24 : vector<2x1xf32> to vector<2x128xf32>
    %26 = arith.divf %22, %25 : vector<2x128xf32>
    %cst_16 = arith.constant dense<0.000000e+00> : vector<32x2xf32>
    %27 = tpu.matmul %10, %26, %cst_16 {dimension_numbers = #tpu.dot_dimension_numbers<[1], [1], [0], [0], [0, 0, 1, 0], [], []>} : vector<32x128xf32>, vector<2x128xf32>, vector<32x2xf32> -> vector<32x2xf32>
    %28 = tpu.transpose %27, [1, 0] : vector<32x2xf32> -> vector<2x32xf32>
    %c1 = arith.constant 1 : index
    %c0_17 = arith.constant 0 : index
    %c0_18 = arith.constant 0 : index
    %29 = vector.load %arg2[%c1, %c0_17, %c0_18] : memref<4x32x128xf32, #tpu.memory_space<vmem>>, vector<1x32x128xf32>
    %30 = vector.shape_cast %29 : vector<1x32x128xf32> to vector<32x128xf32>
    %31 = vector.extract_strided_slice %8 {offsets = [2, 0], sizes = [2, 32], strides = [1, 1]} : vector<8x32xf32> to vector<2x32xf32>
    %cst_19 = arith.constant dense<0.000000e+00> : vector<2x128xf32>
    %32 = tpu.matmul %31, %30, %cst_19 {dimension_numbers = #tpu.dot_dimension_numbers<[1], [0], [0], [1], [0, 0, 1, 1], [], []>} : vector<2x32xf32>, vector<32x128xf32>, vector<2x128xf32> -> vector<2x128xf32>
    %33 = tpu.iota {dimensions = array<i32: 1>} : vector<2x128xi32>
    %c64_i32_20 = arith.constant 64 : i32
    %34 = vector.broadcast %c64_i32_20 : i32 to vector<2x128xi32>
    %35 = arith.cmpi slt, %33, %34 : vector<2x128xi32>
    %cst_21 = arith.constant -1.000000e+30 : f32
    %36 = vector.broadcast %cst_21 : f32 to vector<2x128xf32>
    %37 = arith.select %35, %32, %36 : vector<2x128xi1>, vector<2x128xf32>
    %cst_22 = arith.constant dense<0xFF800000> : vector<2xf32>
    %38 = vector.multi_reduction <maximumf>, %37, %cst_22 [1] : vector<2x128xf32> to vector<2xf32>
    %39 = vector.shape_cast %38 : vector<2xf32> to vector<2x1xf32>
    %40 = vector.broadcast %39 : vector<2x1xf32> to vector<2x128xf32>
    %41 = arith.subf %37, %40 : vector<2x128xf32>
    %42 = math.exp %41 : vector<2x128xf32>
    %cst_23 = arith.constant dense<0.000000e+00> : vector<2xf32>
    %43 = vector.multi_reduction <add>, %42, %cst_23 [1] : vector<2x128xf32> to vector<2xf32>
    %44 = vector.shape_cast %43 : vector<2xf32> to vector<2x1xf32>
    %45 = vector.broadcast %44 : vector<2x1xf32> to vector<2x128xf32>
    %46 = arith.divf %42, %45 : vector<2x128xf32>
    %cst_24 = arith.constant dense<0.000000e+00> : vector<32x2xf32>
    %47 = tpu.matmul %30, %46, %cst_24 {dimension_numbers = #tpu.dot_dimension_numbers<[1], [1], [0], [0], [0, 0, 1, 0], [], []>} : vector<32x128xf32>, vector<2x128xf32>, vector<32x2xf32> -> vector<32x2xf32>
    %48 = tpu.transpose %47, [1, 0] : vector<32x2xf32> -> vector<2x32xf32>
    %c2 = arith.constant 2 : index
    %c0_25 = arith.constant 0 : index
    %c0_26 = arith.constant 0 : index
    %49 = vector.load %arg2[%c2, %c0_25, %c0_26] : memref<4x32x128xf32, #tpu.memory_space<vmem>>, vector<1x32x128xf32>
    %50 = vector.shape_cast %49 : vector<1x32x128xf32> to vector<32x128xf32>
    %51 = vector.extract_strided_slice %8 {offsets = [4, 0], sizes = [2, 32], strides = [1, 1]} : vector<8x32xf32> to vector<2x32xf32>
    %cst_27 = arith.constant dense<0.000000e+00> : vector<2x128xf32>
    %52 = tpu.matmul %51, %50, %cst_27 {dimension_numbers = #tpu.dot_dimension_numbers<[1], [0], [0], [1], [0, 0, 1, 1], [], []>} : vector<2x32xf32>, vector<32x128xf32>, vector<2x128xf32> -> vector<2x128xf32>
    %53 = tpu.iota {dimensions = array<i32: 1>} : vector<2x128xi32>
    %c64_i32_28 = arith.constant 64 : i32
    %54 = vector.broadcast %c64_i32_28 : i32 to vector<2x128xi32>
    %55 = arith.cmpi slt, %53, %54 : vector<2x128xi32>
    %cst_29 = arith.constant -1.000000e+30 : f32
    %56 = vector.broadcast %cst_29 : f32 to vector<2x128xf32>
    %57 = arith.select %55, %52, %56 : vector<2x128xi1>, vector<2x128xf32>
    %cst_30 = arith.constant dense<0xFF800000> : vector<2xf32>
    %58 = vector.multi_reduction <maximumf>, %57, %cst_30 [1] : vector<2x128xf32> to vector<2xf32>
    %59 = vector.shape_cast %58 : vector<2xf32> to vector<2x1xf32>
    %60 = vector.broadcast %59 : vector<2x1xf32> to vector<2x128xf32>
    %61 = arith.subf %57, %60 : vector<2x128xf32>
    %62 = math.exp %61 : vector<2x128xf32>
    %cst_31 = arith.constant dense<0.000000e+00> : vector<2xf32>
    %63 = vector.multi_reduction <add>, %62, %cst_31 [1] : vector<2x128xf32> to vector<2xf32>
    %64 = vector.shape_cast %63 : vector<2xf32> to vector<2x1xf32>
    %65 = vector.broadcast %64 : vector<2x1xf32> to vector<2x128xf32>
    %66 = arith.divf %62, %65 : vector<2x128xf32>
    %cst_32 = arith.constant dense<0.000000e+00> : vector<32x2xf32>
    %67 = tpu.matmul %50, %66, %cst_32 {dimension_numbers = #tpu.dot_dimension_numbers<[1], [1], [0], [0], [0, 0, 1, 0], [], []>} : vector<32x128xf32>, vector<2x128xf32>, vector<32x2xf32> -> vector<32x2xf32>
    %68 = tpu.transpose %67, [1, 0] : vector<32x2xf32> -> vector<2x32xf32>
    %c3 = arith.constant 3 : index
    %c0_33 = arith.constant 0 : index
    %c0_34 = arith.constant 0 : index
    %69 = vector.load %arg2[%c3, %c0_33, %c0_34] : memref<4x32x128xf32, #tpu.memory_space<vmem>>, vector<1x32x128xf32>
    %70 = vector.shape_cast %69 : vector<1x32x128xf32> to vector<32x128xf32>
    %71 = vector.extract_strided_slice %8 {offsets = [6, 0], sizes = [2, 32], strides = [1, 1]} : vector<8x32xf32> to vector<2x32xf32>
    %cst_35 = arith.constant dense<0.000000e+00> : vector<2x128xf32>
    %72 = tpu.matmul %71, %70, %cst_35 {dimension_numbers = #tpu.dot_dimension_numbers<[1], [0], [0], [1], [0, 0, 1, 1], [], []>} : vector<2x32xf32>, vector<32x128xf32>, vector<2x128xf32> -> vector<2x128xf32>
    %73 = tpu.iota {dimensions = array<i32: 1>} : vector<2x128xi32>
    %c64_i32_36 = arith.constant 64 : i32
    %74 = vector.broadcast %c64_i32_36 : i32 to vector<2x128xi32>
    %75 = arith.cmpi slt, %73, %74 : vector<2x128xi32>
    %cst_37 = arith.constant -1.000000e+30 : f32
    %76 = vector.broadcast %cst_37 : f32 to vector<2x128xf32>
    %77 = arith.select %75, %72, %76 : vector<2x128xi1>, vector<2x128xf32>
    %cst_38 = arith.constant dense<0xFF800000> : vector<2xf32>
    %78 = vector.multi_reduction <maximumf>, %77, %cst_38 [1] : vector<2x128xf32> to vector<2xf32>
    %79 = vector.shape_cast %78 : vector<2xf32> to vector<2x1xf32>
    %80 = vector.broadcast %79 : vector<2x1xf32> to vector<2x128xf32>
    %81 = arith.subf %77, %80 : vector<2x128xf32>
    %82 = math.exp %81 : vector<2x128xf32>
    %cst_39 = arith.constant dense<0.000000e+00> : vector<2xf32>
    %83 = vector.multi_reduction <add>, %82, %cst_39 [1] : vector<2x128xf32> to vector<2xf32>
    %84 = vector.shape_cast %83 : vector<2xf32> to vector<2x1xf32>
    %85 = vector.broadcast %84 : vector<2x1xf32> to vector<2x128xf32>
    %86 = arith.divf %82, %85 : vector<2x128xf32>
    %cst_40 = arith.constant dense<0.000000e+00> : vector<32x2xf32>
    %87 = tpu.matmul %70, %86, %cst_40 {dimension_numbers = #tpu.dot_dimension_numbers<[1], [1], [0], [0], [0, 0, 1, 0], [], []>} : vector<32x128xf32>, vector<2x128xf32>, vector<32x2xf32> -> vector<32x2xf32>
    %88 = tpu.transpose %87, [1, 0] : vector<32x2xf32> -> vector<2x32xf32>
    %89 = tpu.concatenate %28, %48, %68, %88 in 0 : vector<2x32xf32>, vector<2x32xf32>, vector<2x32xf32>, vector<2x32xf32> -> vector<8x32xf32>
    %c0_41 = arith.constant 0 : index
    %c0_42 = arith.constant 0 : index
    %90 = vector.load %arg6[%c0_41, %c0_42] : memref<32x128xf32, #tpu.memory_space<vmem>>, vector<32x128xf32>
    %cst_43 = arith.constant dense<0.000000e+00> : vector<8x128xf32>
    %91 = tpu.matmul %89, %90, %cst_43 {dimension_numbers = #tpu.dot_dimension_numbers<[1], [0], [0], [1], [0, 0, 1, 1], [], []>} : vector<8x32xf32>, vector<32x128xf32>, vector<8x128xf32> -> vector<8x128xf32>
    %c0_44 = arith.constant 0 : index
    %c0_45 = arith.constant 0 : index
    %92 = vector.load %arg7[%c0_44, %c0_45] : memref<8x128xf32, #tpu.memory_space<vmem>>, vector<8x128xf32>
    tpu.vector_store %arg7[%c0_44, %c0_45], %91 {strides = array<i32>} : memref<8x128xf32, #tpu.memory_space<vmem>>, vector<8x128xf32>,
    return
  }
  func.func @transform_0(%arg0: i32) -> (i32, i32) {
    %c0_i32 = arith.constant 0 : i32
    %c0_i32_0 = arith.constant 0 : i32
    return %arg0, %c0_i32 : i32, i32
  }
  func.func @transform_1(%arg0: i32) -> (i32, i32, i32) {
    %c0_i32 = arith.constant 0 : i32
    %c0_i32_0 = arith.constant 0 : i32
    %c0_i32_1 = arith.constant 0 : i32
    return %arg0, %c0_i32, %c0_i32_0 : i32, i32, i32
  }
  func.func @transform_2(%arg0: i32) -> (i32, i32) {
    %c0_i32 = arith.constant 0 : i32
    %c0_i32_0 = arith.constant 0 : i32
    %c0_i32_1 = arith.constant 0 : i32
    return %c0_i32, %c0_i32_0 : i32, i32
  }
  func.func @transform_3(%arg0: i32) -> (i32, i32) {
    %c0_i32 = arith.constant 0 : i32
    %c0_i32_0 = arith.constant 0 : i32
    %c0_i32_1 = arith.constant 0 : i32
    return %c0_i32, %c0_i32_0 : i32, i32
  }
  func.func @transform_4(%arg0: i32) -> (i32, i32) {
    %c0_i32 = arith.constant 0 : i32
    %c0_i32_0 = arith.constant 0 : i32
    %c0_i32_1 = arith.constant 0 : i32
    return %c0_i32, %c0_i32_0 : i32, i32
  }
  func.func @transform_5(%arg0: i32) -> (i32, i32) {
    %c0_i32 = arith.constant 0 : i32
    %c0_i32_0 = arith.constant 0 : i32
    %c0_i32_1 = arith.constant 0 : i32
    return %c0_i32, %c0_i32_0 : i32, i32
  }
  func.func @transform_6(%arg0: i32) -> (i32, i32) {
    %c0_i32 = arith.constant 0 : i32
    %c0_i32_0 = arith.constant 0 : i32
    return %arg0, %c0_i32 : i32, i32
  }
}

</mosaic_0001>

<llo_original>
// kernel: tpu_custom_call.1
$region0: #{tpu_custom_call.1}
  #allocation0 [shape = 'u32[]', space=smem, size = 0x4, offset = 0x4, fixed_abs, tag = 'smem constant byte address 0x4 - core index']
  #allocation1 [shape = 'u32[72,128]{1,0:T(1,128)}', space=vmem, size = 0x9000, scoped, tag = 'internal scratch']
  %s0 = inlined_call_operand.vmem [shape: f32[16,96], index: 0, kind: input, shape index: {}]
  %s1 = inlined_call_operand.hbm [shape: f32[8,32,128], index: 1, kind: input, shape index: {}]
  %s2 = inlined_call_operand.vmem [shape: f32[96,32], index: 2, kind: input, shape index: {}]
  %s3 = inlined_call_operand.vmem [shape: f32[32,32], index: 3, kind: input, shape index: {}]
  %s4 = inlined_call_operand.vmem [shape: f32[32,32], index: 4, kind: input, shape index: {}]
  %s5 = inlined_call_operand.vmem [shape: f32[32,128], index: 5, kind: input, shape index: {}]
  %s6 = inlined_call_operand.hbm [shape: f32[16,128], index: 6, kind: output, shape index: {}]
  %s7 = sld [smem:[#allocation0]]
  $region61: #{tpu_custom_call.1} parent=0
    _
  %s9 = ssub.s32 1, %s7
  %s10 = scalar_select 0, %s9, %s7
  $region1: #{tpu_custom_call.1} parent=0
    #allocation2 [shape = 'u8[131072]{0}', space=vmem, size = 0x20000, scoped, tag = 'input window, operand 1']
    #allocation3 [shape = 's32[2]{0}', space=sflag, size = 0x8, scoped, tag = 'scoped memory for tpu_custom_call.1']
    #allocation4 [shape = 's32[2]{0}', space=sflag, size = 0x8, scoped, tag = 'scoped memory for tpu_custom_call.1']
    #allocation5 [shape = 'u8[8192]{0}', space=vmem, size = 0x2000, scoped, tag = 'output window, operand 0']
    %11 = vsyncpa [#allocation3], 0
    %s12 = scalar_lea.sflag [#allocation3], 1
    %13 = vsyncpa %s12, 0
    %14 = vsyncpa [#allocation4], 0
    %s15 = scalar_lea.sflag [#allocation4], 1
    %16 = vsyncpa %s15, 0
    loop: start=0, step=1, limit=4
    $region2: #{tpu_custom_call.1} parent=1 // loop_pre_header
      _
    $region3: #{tpu_custom_call.1} parent=1 // loop_header
      %s18 = sphi 0, %s22
      %p19 = scmp.ge.s32.totalorder %s18, 4
      %s28 = sphi 0, %s30
      %s31 = sphi 0, %s28
      %s32 = sphi 0, %s31
      %s48 = sphi 0, %s32
      %s54 = sphi 0, %s56
      %s57 = sphi 0, %s54
      %s58 = sphi 0, %s57
      %s74 = sphi 0, %s58
      %s78 = sphi 0, %s78
      %s80 = sphi 0, %s78
      %s81 = sphi 0, %s80
      %s95 = sphi 0, %s81
      %s99 = sphi 0, %s99
      %s101 = sphi 0, %s99
      %s102 = sphi 0, %s101
      %s116 = sphi 0, %s102
      %s120 = sphi 0, %s120
      %s122 = sphi 0, %s120
      %s123 = sphi 0, %s122
      %s137 = sphi 0, %s123
      %s141 = sphi 0, %s141
      %s143 = sphi 0, %s141
      %s144 = sphi 0, %s143
      %s158 = sphi 0, %s144
      %s164 = sphi 0, %s166
      %s167 = sphi 0, %s164
      %s168 = sphi 0, %s167
      %s184 = sphi 0, %s168
    $region4: #{tpu_custom_call.1} parent=1 // loop_header_branch
      %21 = sbr.rel (%p19) target = $region8
    $region5: #{tpu_custom_call.1} parent=1 // loop_body
      %s23 = ssub.s32 %s18, 1
      %s24 = ssub.s32 %s18, 2
      %s25 = sadd.s32 %s18, 1
      %s26 = ssub.s32 %s18, %s25
      %p27 = scmp.eq.s32.totalorder %s26, 0
      %s29 = sadd.s32 %s28, 1
      %s30 = scalar_select %p27, %s28, %s29
      %p33 = pneg %p27
      %p34 = scmp.eq.s32.totalorder %s18, 1
      %p35 = por %p33, %p34
      %p36 = scmp.ne.s32.totalorder %s28, %s31
      %p37 = scmp.eq.s32.totalorder %s18, 0
      %p38 = por %p36, %p37
      %p39 = scmp.ne.s32.totalorder %s28, %s31
      %p40 = scmp.eq.s32.totalorder %s23, 1
      %p41 = por %p39, %p40
      %p42 = scmp.ne.s32.totalorder %s31, %s32
      %p43 = scmp.eq.s32.totalorder %s23, 0
      %p44 = por %p42, %p43
      %p45 = scmp.ne.s32.totalorder %s31, %s32
      %p46 = scmp.eq.s32.totalorder %s24, 1
      %p47 = por %p45, %p46
      %p49 = scmp.ne.s32.totalorder %s32, %s48
      %p50 = scmp.eq.s32.totalorder %s24, 0
      %p51 = por %p49, %p50
      %s52 = ssub.s32 %s18, %s25
      %p53 = scmp.eq.s32.totalorder %s52, 0
      %s55 = sadd.s32 %s54, 1
      %s56 = scalar_select %p53, %s54, %s55
      %p59 = pneg %p53
      %p60 = scmp.eq.s32.totalorder %s18, 1
      %p61 = por %p59, %p60
      %p62 = scmp.ne.s32.totalorder %s54, %s57
      %p63 = scmp.eq.s32.totalorder %s18, 0
      %p64 = por %p62, %p63
      %p65 = scmp.ne.s32.totalorder %s54, %s57
      %p66 = scmp.eq.s32.totalorder %s23, 1
      %p67 = por %p65, %p66
      %p68 = scmp.ne.s32.totalorder %s57, %s58
      %p69 = scmp.eq.s32.totalorder %s23, 0
      %p70 = por %p68, %p69
      %p71 = scmp.ne.s32.totalorder %s57, %s58
      %p72 = scmp.eq.s32.totalorder %s24, 1
      %p73 = por %p71, %p72
      %p75 = scmp.ne.s32.totalorder %s58, %s74
      %p76 = scmp.eq.s32.totalorder %s24, 0
      %p77 = por %p75, %p76
      %s79 = sadd.s32 %s78, 1
      %p82 = scmp.eq.s32.totalorder %s18, 1
      %p83 = scmp.ne.s32.totalorder %s78, %s80
      %p84 = scmp.eq.s32.totalorder %s18, 0
      %p85 = por %p83, %p84
      %p86 = scmp.ne.s32.totalorder %s78, %s80
      %p87 = scmp.eq.s32.totalorder %s23, 1
      %p88 = por %p86, %p87
      %p89 = scmp.ne.s32.totalorder %s80, %s81
      %p90 = scmp.eq.s32.totalorder %s23, 0
      %p91 = por %p89, %p90
      %p92 = scmp.ne.s32.totalorder %s80, %s81
      %p93 = scmp.eq.s32.totalorder %s24, 1
      %p94 = por %p92, %p93
      %p96 = scmp.ne.s32.totalorder %s81, %s95
      %p97 = scmp.eq.s32.totalorder %s24, 0
      %p98 = por %p96, %p97
      %s100 = sadd.s32 %s99, 1
      %p103 = scmp.eq.s32.totalorder %s18, 1
      %p104 = scmp.ne.s32.totalorder %s99, %s101
      %p105 = scmp.eq.s32.totalorder %s18, 0
      %p106 = por %p104, %p105
      %p107 = scmp.ne.s32.totalorder %s99, %s101
      %p108 = scmp.eq.s32.totalorder %s23, 1
      %p109 = por %p107, %p108
      %p110 = scmp.ne.s32.totalorder %s101, %s102
      %p111 = scmp.eq.s32.totalorder %s23, 0
      %p112 = por %p110, %p111
      %p113 = scmp.ne.s32.totalorder %s101, %s102
      %p114 = scmp.eq.s32.totalorder %s24, 1
      %p115 = por %p113, %p114
      %p117 = scmp.ne.s32.totalorder %s102, %s116
      %p118 = scmp.eq.s32.totalorder %s24, 0
      %p119 = por %p117, %p118
      %s121 = sadd.s32 %s120, 1
      %p124 = scmp.eq.s32.totalorder %s18, 1
      %p125 = scmp.ne.s32.totalorder %s120, %s122
      %p126 = scmp.eq.s32.totalorder %s18, 0
      %p127 = por %p125, %p126
      %p128 = scmp.ne.s32.totalorder %s120, %s122
      %p129 = scmp.eq.s32.totalorder %s23, 1
      %p130 = por %p128, %p129
      %p131 = scmp.ne.s32.totalorder %s122, %s123
      %p132 = scmp.eq.s32.totalorder %s23, 0
      %p133 = por %p131, %p132
      %p134 = scmp.ne.s32.totalorder %s122, %s123
      %p135 = scmp.eq.s32.totalorder %s24, 1
      %p136 = por %p134, %p135
      %p138 = scmp.ne.s32.totalorder %s123, %s137
      %p139 = scmp.eq.s32.totalorder %s24, 0
      %p140 = por %p138, %p139
      %s142 = sadd.s32 %s141, 1
      %p145 = scmp.eq.s32.totalorder %s18, 1
      %p146 = scmp.ne.s32.totalorder %s141, %s143
      %p147 = scmp.eq.s32.totalorder %s18, 0
      %p148 = por %p146, %p147
      %p149 = scmp.ne.s32.totalorder %s141, %s143
      %p150 = scmp.eq.s32.totalorder %s23, 1
      %p151 = por %p149, %p150
      %p152 = scmp.ne.s32.totalorder %s143, %s144
      %p153 = scmp.eq.s32.totalorder %s23, 0
      %p154 = por %p152, %p153
      %p155 = scmp.ne.s32.totalorder %s143, %s144
      %p156 = scmp.eq.s32.totalorder %s24, 1
      %p157 = por %p155, %p156
      %p159 = scmp.ne.s32.totalorder %s144, %s158
      %p160 = scmp.eq.s32.totalorder %s24, 0
      %p161 = por %p159, %p160
      %s162 = ssub.s32 %s18, %s25
      %p163 = scmp.eq.s32.totalorder %s162, 0
      %s165 = sadd.s32 %s164, 1
      %s166 = scalar_select %p163, %s164, %s165
      %p169 = pneg %p163
      %p170 = scmp.eq.s32.totalorder %s18, 1
      %p171 = por %p169, %p170
      %p172 = scmp.ne.s32.totalorder %s164, %s167
      %p173 = scmp.eq.s32.totalorder %s18, 0
      %p174 = por %p172, %p173
      %p175 = scmp.ne.s32.totalorder %s164, %s167
      %p176 = scmp.eq.s32.totalorder %s23, 1
      %p177 = por %p175, %p176
      %p178 = scmp.ne.s32.totalorder %s167, %s168
      %p179 = scmp.eq.s32.totalorder %s23, 0
      %p180 = por %p178, %p179
      %p181 = scmp.ne.s32.totalorder %s167, %s168
      %p182 = scmp.eq.s32.totalorder %s24, 1
      %p183 = por %p181, %p182
      %p185 = scmp.ne.s32.totalorder %s168, %s184
      %p186 = scmp.eq.s32.totalorder %s24, 0
      %p187 = por %p185, %p186
      %p188 = scmp.le.s32.totalorder 1, %s18
      %p189 = scmp.lt.s32.totalorder %s18, 3
      %p190 = pnand %p188, %p189
      %p191 = pneg %p190
      // Predicated region
      $region9: #{tpu_custom_call.1} parent=5 // pred_check
        _
      $region10: #{tpu_custom_call.1} parent=5 // pred_check_branch
        %193 = sbr.rel (%p190) target = $region12
      $region11: #{tpu_custom_call.1} parent=5 // pred_region
        %s194 = ssub.s32 %s18, 1
        // Predicated region
        $region13: #{tpu_custom_call.1} parent=11 // pred_check
          %p195 = pneg %p91
        $region14: #{tpu_custom_call.1} parent=11 // pred_check_branch
          %197 = sbr.rel (%p195) target = $region16
        $region15: #{tpu_custom_call.1} parent=11 // pred_region
          _
        $region16: #{tpu_custom_call.1} parent=11 // pred_fallthru
          _
        // Predicated region
        $region17: #{tpu_custom_call.1} parent=11 // pred_check
          %p198 = pneg %p112
        $region18: #{tpu_custom_call.1} parent=11 // pred_check_branch
          %200 = sbr.rel (%p198) target = $region20
        $region19: #{tpu_custom_call.1} parent=11 // pred_region
          _
        $region20: #{tpu_custom_call.1} parent=11 // pred_fallthru
          _
        // Predicated region
        $region21: #{tpu_custom_call.1} parent=11 // pred_check
          %p201 = pneg %p133
        $region22: #{tpu_custom_call.1} parent=11 // pred_check_branch
          %203 = sbr.rel (%p201) target = $region24
        $region23: #{tpu_custom_call.1} parent=11 // pred_region
          _
        $region24: #{tpu_custom_call.1} parent=11 // pred_fallthru
          _
        // Predicated region
        $region25: #{tpu_custom_call.1} parent=11 // pred_check
          %p204 = pneg %p154
        $region26: #{tpu_custom_call.1} parent=11 // pred_check_branch
          %206 = sbr.rel (%p204) target = $region28
        $region27: #{tpu_custom_call.1} parent=11 // pred_region
          _
        $region28: #{tpu_custom_call.1} parent=11 // pred_fallthru
          _
      $region12: #{tpu_custom_call.1} parent=5 // pred_fallthru
        _
      %p207 = scmp.lt.s32.totalorder %s18, 2
      // Predicated region
      $region29: #{tpu_custom_call.1} parent=5 // pred_check
        %p208 = pneg %p207
      $region30: #{tpu_custom_call.1} parent=5 // pred_check_branch
        %210 = sbr.rel (%p208) target = $region32
      $region31: #{tpu_custom_call.1} parent=5 // pred_region
        // Predicated region
        $region33: #{tpu_custom_call.1} parent=31 // pred_check
          %p211 = pneg %p38
        $region34: #{tpu_custom_call.1} parent=31 // pred_check_branch
          %213 = sbr.rel (%p211) target = $region36
        $region35: #{tpu_custom_call.1} parent=31 // pred_region
          %p214 = scmp.lt.s32.totalorder %s18, 1
          %s215 = scalar_select %p214, %s18, 1
          %s216 = smul.addr %s215, 8
          %s217 = scalar_lea.vmem %s0, %s216
        $region36: #{tpu_custom_call.1} parent=31 // pred_fallthru
          _
        // Predicated region
        $region37: #{tpu_custom_call.1} parent=31 // pred_check
          %p218 = pneg %p64
        $region38: #{tpu_custom_call.1} parent=31 // pred_check_branch
          %220 = sbr.rel (%p218) target = $region40
        $region39: #{tpu_custom_call.1} parent=31 // pred_region
          %s221 = sand.u32 %s54, 1
          %s222 = scalar_lea.sflag [#allocation3], %s221
          %s223 = sand.u32 %s54, 1
          %s224 = smul.addr %s223, 128
          %s225 = scalar_lea.vmem [#allocation2], %s224
          %s226 = smul.u32 4, %s18
          %228 = vsyncadd %s222, 0
          %s229 = smul.addr %s226, 4
          %s230 = smul.addr %s229, 8
          %s231 = scalar_lea.hbm %s1, %s230
          %s232 = sshll.u32 %s231, 4
          %s233 = int_to_ptr.hbm [resolvable:$true] %s232
          %s234 = sshll.u32 %s225, 4
          %s235 = int_to_ptr.vmem [resolvable:$true] %s234
          %240 = dma.hbm_to_vmem [thread:$0]  %s233, 2048, %s235, %s222, 128, 128, 8
        $region40: #{tpu_custom_call.1} parent=31 // pred_fallthru
          _
      $region32: #{tpu_custom_call.1} parent=5 // pred_fallthru
        _
      %p241 = scmp.le.s32.totalorder 1, %s18
      %p242 = scmp.lt.s32.totalorder %s18, 3
      %p243 = pnand %p241, %p242
      %p244 = pneg %p243
      // Predicated region
      $region41: #{tpu_custom_call.1} parent=5 // pred_check
        _
      $region42: #{tpu_custom_call.1} parent=5 // pred_check_branch
        %246 = sbr.rel (%p243) target = $region44
      $region43: #{tpu_custom_call.1} parent=5 // pred_region
        %s247 = ssub.s32 %s18, 1
        %s248 = sand.u32 %s57, 1
        %s249 = scalar_lea.sflag [#allocation3], %s248
        %s250 = sand.u32 %s57, 1
        %s251 = smul.addr %s250, 128
        %s252 = scalar_lea.vmem [#allocation2], %s251
        // Predicated region
        $region45: #{tpu_custom_call.1} parent=43 // pred_check
          %p253 = pneg %p70
        $region46: #{tpu_custom_call.1} parent=43 // pred_check_branch
          %255 = sbr.rel (%p253) target = $region48
        $region47: #{tpu_custom_call.1} parent=43 // pred_region
          %257 = dma.done %s249, 2048
        $region48: #{tpu_custom_call.1} parent=43 // pred_fallthru
          _
        %p258 = scmp.lt.s32.totalorder %s23, 1
        %s259 = scalar_select %p258, %s23, 1
        %s260 = smul.addr %s259, 8
        %s261 = scalar_lea.vmem %s0, %s260
        %p262 = pneg %p44
        %p263 = pneg %p41
        %s264 = sand.u32 %s57, 1
        %s265 = scalar_lea.sflag [#allocation3], %s264
        %s266 = sand.u32 %s57, 1
        %s267 = smul.addr %s266, 128
        %s268 = scalar_lea.vmem [#allocation2], %s267
        %p269 = pneg %p70
        %p270 = pneg %p67
        %p271 = pneg %p91
        %p272 = pneg %p88
        %p273 = pneg %p112
        %p274 = pneg %p109
        %p275 = pneg %p133
        %p276 = pneg %p130
        %p277 = pneg %p154
        %p278 = pneg %p151
        %p279 = pneg %p180
        %p280 = pneg %p177
        %s281 = sand.u32 %s167, 1
        %s282 = scalar_lea.sflag [#allocation4], %s281
        %s283 = sand.u32 %s167, 1
        %s284 = smul.addr %s283, 8
        %s285 = scalar_lea.vmem [#allocation5], %s284
        %p286 = scmp.lt.s32.totalorder %s23, 1
        %s287 = scalar_select %p286, %s23, 1
        %s288 = smul.addr %s287, 8
        %s289 = scalar_lea.vmem %s0, %s288
        %s290 = smul.u32 4, %s23
        %v291 = vld [vmem:[%s289] sm:$0xff]
        %v292 = vld [vmem:[%s2] sm:$0xff]
        %v293 = vld [vmem:[%s2 + $0x8] sm:$0xff]
        %v294 = vld [vmem:[%s2 + $0x10] sm:$0xff]
        %v295 = vld [vmem:[%s2 + $0x18] sm:$0xff]
        %v296 = vld [vmem:[%s2 + $0x20] sm:$0xff]
        %v297 = vld [vmem:[%s2 + $0x28] sm:$0xff]
        %v298 = vld [vmem:[%s2 + $0x30] sm:$0xff]
        %v299 = vld [vmem:[%s2 + $0x38] sm:$0xff]
        %v300 = vld [vmem:[%s2 + $0x40] sm:$0xff]
        %v301 = vld [vmem:[%s2 + $0x48] sm:$0xff]
        %v302 = vld [vmem:[%s2 + $0x50] sm:$0xff]
        %v303 = vld [vmem:[%s2 + $0x58] sm:$0xff]
        %vm304 = vcmask 785408
        %v306 = vsel %vm304, %v291, 0
        %308 = vmatpush.msra.mxu0 0.0
        %309 = vmatpush.msra.mxu0 0.0
        %310 = vmatpush.msra.mxu0 0.0
        %311 = vmatpush.msra.mxu0 0.0
        %312 = vmatpush.msra.mxu0 %v303
        %313 = vmatpush.msra.mxu0 %v302
        %314 = vmatpush.msra.mxu0 %v301
        %315 = vmatpush.msra.mxu0 %v300
        %316 = vmatpush.msra.mxu0 %v299
        %317 = vmatpush.msra.mxu0 %v298
        %318 = vmatpush.msra.mxu0 %v297
        %319 = vmatpush.msra.mxu0 %v296
        %320 = vmatpush.msra.mxu0 %v295
        %321 = vmatpush.msra.mxu0 %v294
        %322 = vmatpush.msra.mxu0 %v293
        %323 = vmatpush.msra.mxu0 %v292
        %324 = vmatmul.f32.gmra.mxu0 %v306
        %v325 = vpop.f32.mrf.mxu0
        %v326 = vadd.f32 0.0, %v325
        %327 = vdwg.mxu0
        %v328 = vtanh.pop %v326
        %v329 = vld [vmem:[%s3] sm:$0xff]
        %v330 = vld [vmem:[%s3 + $0x8] sm:$0xff]
        %v331 = vld [vmem:[%s3 + $0x10] sm:$0xff]
        %v332 = vld [vmem:[%s3 + $0x18] sm:$0xff]
        %vm333 = vcmask 261120
        %v335 = vsel %vm333, %v328, 0
        %337 = vmatpush.msra.mxu0 0.0
        %338 = vmatpush.msra.mxu0 0.0
        %339 = vmatpush.msra.mxu0 0.0
        %340 = vmatpush.msra.mxu0 0.0
        %341 = vmatpush.msra.mxu0 0.0
        %342 = vmatpush.msra.mxu0 0.0
        %343 = vmatpush.msra.mxu0 0.0
        %344 = vmatpush.msra.mxu0 0.0
        %345 = vmatpush.msra.mxu0 0.0
        %346 = vmatpush.msra.mxu0 0.0
        %347 = vmatpush.msra.mxu0 0.0
        %348 = vmatpush.msra.mxu0 0.0
        %349 = vmatpush.msra.mxu0 %v332
        %350 = vmatpush.msra.mxu0 %v331
        %351 = vmatpush.msra.mxu0 %v330
        %352 = vmatpush.msra.mxu0 %v329
        %353 = vmatmul.f32.gmra.mxu0 %v335
        %v354 = vpop.f32.mrf.mxu0
        %v355 = vadd.f32 0.0, %v354
        %356 = vdwg.mxu0
        %v357 = vtanh.pop %v355
        %v358 = vld [vmem:[%s4] sm:$0xff]
        %v359 = vld [vmem:[%s4 + $0x8] sm:$0xff]
        %v360 = vld [vmem:[%s4 + $0x10] sm:$0xff]
        %v361 = vld [vmem:[%s4 + $0x18] sm:$0xff]
        %v363 = vsel %vm333, %v357, 0
        %365 = vmatpush.msra.mxu0 0.0
        %366 = vmatpush.msra.mxu0 0.0
        %367 = vmatpush.msra.mxu0 0.0
        %368 = vmatpush.msra.mxu0 0.0
        %369 = vmatpush.msra.mxu0 0.0
        %370 = vmatpush.msra.mxu0 0.0
        %371 = vmatpush.msra.mxu0 0.0
        %372 = vmatpush.msra.mxu0 0.0
        %373 = vmatpush.msra.mxu0 0.0
        %374 = vmatpush.msra.mxu0 0.0
        %375 = vmatpush.msra.mxu0 0.0
        %376 = vmatpush.msra.mxu0 0.0
        %377 = vmatpush.msra.mxu0 %v361
        %378 = vmatpush.msra.mxu0 %v360
        %379 = vmatpush.msra.mxu0 %v359
        %380 = vmatpush.msra.mxu0 %v358
        %381 = vmatmul.f32.gmra.mxu0 %v363
        %v382 = vpop.f32.mrf.mxu0
        %v383 = vadd.f32 0.0, %v382
        %384 = vdwg.mxu0
        %v385 = vld [vmem:[%s252] sm:$0xff]
        %v386 = vld [vmem:[%s252 + $0x8] sm:$0xff]
        %v387 = vld [vmem:[%s252 + $0x10] sm:$0xff]
        %v388 = vld [vmem:[%s252 + $0x18] sm:$0xff]
        %v390 = vsel %vm333, %v383, 0
        %392 = vmatpush.msra.mxu0 0.0
        %393 = vmatpush.msra.mxu0 0.0
        %394 = vmatpush.msra.mxu0 0.0
        %395 = vmatpush.msra.mxu0 0.0
        %396 = vmatpush.msra.mxu0 0.0
        %397 = vmatpush.msra.mxu0 0.0
        %398 = vmatpush.msra.mxu0 0.0
        %399 = vmatpush.msra.mxu0 0.0
        %400 = vmatpush.msra.mxu0 0.0
        %401 = vmatpush.msra.mxu0 0.0
        %402 = vmatpush.msra.mxu0 0.0
        %403 = vmatpush.msra.mxu0 0.0
        %404 = vmatpush.msra.mxu0 %v388
        %405 = vmatpush.msra.mxu0 %v387
        %406 = vmatpush.msra.mxu0 %v386
        %407 = vmatpush.msra.mxu0 %v385
        %408 = vmatmul.f32.gmra.mxu0 %v390
        %v409 = vpop.f32.mrf.mxu0
        %v410 = vadd.f32 0.0, %v409
        %411 = vdwg.mxu0
        %v412 = vlaneseq
        %v413 = vand.u32 %v412, 127
        %vm414 = vcmp.lt.s32.totalorder %v413, 64
        %v415 = vsel %vm414, %v410, -1e+30
        %vm416 = vcmask 1041408
        %v417 = vsel %vm416, %v415, -inf
        %418 = vmax.xlane.f32.xlu0 %v417
        %v419 = vpop.xlane.xlu0 %418
        %v420 = vsub.f32 %v415, %v419
        %v421 = vmul.f32 %v420, 1.442695
        %v422 = vpow.pop %v421
        %v423 = vsel %vm416, %v422, 0.0
        %424 = vadd.xlane.f32.xlu0 %v423
        %v425 = vpop.xlane.xlu0 %424
        %v426 = vrcp.pop %v425
        %v427 = vmul.f32 %v425, %v426
        %v428 = vsub.f32 1.0, %v427
        %v429 = vmul.f32 %v426, %v428
        %v430 = vadd.f32 %v426, %v429
        %vm431 = vweird.f32 %v425
        %vm432 = vweird.f32 %v426
        %vm433 = vmor %vm431, %vm432
        %v434 = vsel %vm433, %v426, %v430
        %v435 = vand.u32 2147483647, %v425
        %vm436 = vcmp.eq.f32.partialorder %v435, 8.507059e+37
        %v437 = vand.u32 %v425, 2147483648
        %v438 = vor.u32 1.1754944e-38, %v437
        %v439 = vsel %vm436, %v438, %v434
        %v440 = vmul.f32 %v422, %v439
        %441 = vmatpush.xpose.msra.mxu0 0.0
        %442 = vmatpush.xpose.msra.mxu0 0.0
        %443 = vmatpush.xpose.msra.mxu0 0.0
        %444 = vmatpush.xpose.msra.mxu0 0.0
        %445 = vmatpush.xpose.msra.mxu0 0.0
        %446 = vmatpush.xpose.msra.mxu0 0.0
        %447 = vmatpush.xpose.msra.mxu0 0.0
        %448 = vmatpush.xpose.msra.mxu0 0.0
        %449 = vmatpush.xpose.msra.mxu0 0.0
        %450 = vmatpush.xpose.msra.mxu0 0.0
        %451 = vmatpush.xpose.msra.mxu0 0.0
        %452 = vmatpush.xpose.msra.mxu0 0.0
        %453 = vmatpush.xpose.msra.mxu0 0.0
        %454 = vmatpush.xpose.msra.mxu0 0.0
        %455 = vmatpush.xpose.msra.mxu0 0.0
        %456 = vmatpush.xpose.msra.mxu0 %v440
        %457 = vmatmul.f32.gmra.mxu0 %v385
        %v458 = vpop.f32.mrf.mxu0
        %v459 = vadd.f32 0.0, %v458
        %460 = vmatmul.f32.gmra.mxu0 %v386
        %v461 = vpop.f32.mrf.mxu0
        %v462 = vadd.f32 0.0, %v461
        %463 = vmatmul.f32.gmra.mxu0 %v387
        %v464 = vpop.f32.mrf.mxu0
        %v465 = vadd.f32 0.0, %v464
        %466 = vmatmul.f32.gmra.mxu0 %v388
        %v467 = vpop.f32.mrf.mxu0
        %v468 = vadd.f32 0.0, %v467
        %469 = vdwg.mxu0
        %470 = vxpose.xlu0.b32.start [1/16] %v459, 128
        %471 = vxpose.xlu0.b32.cont [2/16] %v462, 128
        %472 = vxpose.xlu0.b32.cont [3/16] %v465, 128
        %473 = vxpose.xlu0.b32.cont [4/16] %v468, 128
        %474 = vxpose.xlu0.b32.cont [5/16] 0.0, 128
        %475 = vxpose.xlu0.b32.cont [6/16] 0.0, 128
        %476 = vxpose.xlu0.b32.cont [7/16] 0.0, 128
        %477 = vxpose.xlu0.b32.cont [8/16] 0.0, 128
        %478 = vxpose.xlu0.b32.cont [9/16] 0.0, 128
        %479 = vxpose.xlu0.b32.cont [10/16] 0.0, 128
        %480 = vxpose.xlu0.b32.cont [11/16] 0.0, 128
        %481 = vxpose.xlu0.b32.cont [12/16] 0.0, 128
        %482 = vxpose.xlu0.b32.cont [13/16] 0.0, 128
        %483 = vxpose.xlu0.b32.cont [14/16] 0.0, 128
        %484 = vxpose.xlu0.b32.cont [15/16] 0.0, 128
        %485 = vxpose.xlu0.b32.end [16/16] 0.0, 128
        %v486 = vpop.trf.xlu0
        %v487 = vpop.trf.xlu0
        %v488 = vpop.trf.xlu0
        %v489 = vpop.trf.xlu0
        %v490 = vpop.trf.xlu0
        %v491 = vpop.trf.xlu0
        %v492 = vpop.trf.xlu0
        %v493 = vpop.trf.xlu0
        %v494 = vpop.trf.xlu0
        %v495 = vpop.trf.xlu0
        %v496 = vpop.trf.xlu0
        %v497 = vpop.trf.xlu0
        %v498 = vpop.trf.xlu0
        %v499 = vpop.trf.xlu0
        %v500 = vpop.trf.xlu0
        %v501 = vpop.trf.xlu0
        %s502 = scalar_lea.vmem %s252, 32 [#allocation2]
        %v503 = vld [vmem:[%s502] sm:$0xff]
        %v504 = vld [vmem:[%s502 + $0x8] sm:$0xff]
        %v505 = vld [vmem:[%s502 + $0x10] sm:$0xff]
        %v506 = vld [vmem:[%s502 + $0x18] sm:$0xff]
        %v507 = vrot.slane %v383, 2
        %v508 = vsel %vm333, %v507, 0
        %510 = vmatpush.msra.mxu0 0.0
        %511 = vmatpush.msra.mxu0 0.0
        %512 = vmatpush.msra.mxu0 0.0
        %513 = vmatpush.msra.mxu0 0.0
        %514 = vmatpush.msra.mxu0 0.0
        %515 = vmatpush.msra.mxu0 0.0
        %516 = vmatpush.msra.mxu0 0.0
        %517 = vmatpush.msra.mxu0 0.0
        %518 = vmatpush.msra.mxu0 0.0
        %519 = vmatpush.msra.mxu0 0.0
        %520 = vmatpush.msra.mxu0 0.0
        %521 = vmatpush.msra.mxu0 0.0
        %522 = vmatpush.msra.mxu0 %v506
        %523 = vmatpush.msra.mxu0 %v505
        %524 = vmatpush.msra.mxu0 %v504
        %525 = vmatpush.msra.mxu0 %v503
        %526 = vmatmul.f32.gmra.mxu0 %v508
        %v527 = vpop.f32.mrf.mxu0
        %v528 = vadd.f32 0.0, %v527
        %529 = vdwg.mxu0
        %v530 = vsel %vm414, %v528, -1e+30
        %v531 = vsel %vm416, %v530, -inf
        %532 = vmax.xlane.f32.xlu0 %v531
        %v533 = vpop.xlane.xlu0 %532
        %v534 = vsub.f32 %v530, %v533
        %v535 = vmul.f32 %v534, 1.442695
        %v536 = vpow.pop %v535
        %v537 = vsel %vm416, %v536, 0.0
        %538 = vadd.xlane.f32.xlu0 %v537
        %v539 = vpop.xlane.xlu0 %538
        %v540 = vrcp.pop %v539
        %v541 = vmul.f32 %v539, %v540
        %v542 = vsub.f32 1.0, %v541
        %v543 = vmul.f32 %v540, %v542
        %v544 = vadd.f32 %v540, %v543
        %vm545 = vweird.f32 %v539
        %vm546 = vweird.f32 %v540
        %vm547 = vmor %vm545, %vm546
        %v548 = vsel %vm547, %v540, %v544
        %v549 = vand.u32 2147483647, %v539
        %vm550 = vcmp.eq.f32.partialorder %v549, 8.507059e+37
        %v551 = vand.u32 %v539, 2147483648
        %v552 = vor.u32 1.1754944e-38, %v551
        %v553 = vsel %vm550, %v552, %v548
        %v554 = vmul.f32 %v536, %v553
        %555 = vmatpush.xpose.msra.mxu0 0.0
        %556 = vmatpush.xpose.msra.mxu0 0.0
        %557 = vmatpush.xpose.msra.mxu0 0.0
        %558 = vmatpush.xpose.msra.mxu0 0.0
        %559 = vmatpush.xpose.msra.mxu0 0.0
        %560 = vmatpush.xpose.msra.mxu0 0.0
        %561 = vmatpush.xpose.msra.mxu0 0.0
        %562 = vmatpush.xpose.msra.mxu0 0.0
        %563 = vmatpush.xpose.msra.mxu0 0.0
        %564 = vmatpush.xpose.msra.mxu0 0.0
        %565 = vmatpush.xpose.msra.mxu0 0.0
        %566 = vmatpush.xpose.msra.mxu0 0.0
        %567 = vmatpush.xpose.msra.mxu0 0.0
        %568 = vmatpush.xpose.msra.mxu0 0.0
        %569 = vmatpush.xpose.msra.mxu0 0.0
        %570 = vmatpush.xpose.msra.mxu0 %v554
        %571 = vmatmul.f32.gmra.mxu0 %v503
        %v572 = vpop.f32.mrf.mxu0
        %v573 = vadd.f32 0.0, %v572
        %574 = vmatmul.f32.gmra.mxu0 %v504
        %v575 = vpop.f32.mrf.mxu0
        %v576 = vadd.f32 0.0, %v575
        %577 = vmatmul.f32.gmra.mxu0 %v505
        %v578 = vpop.f32.mrf.mxu0
        %v579 = vadd.f32 0.0, %v578
        %580 = vmatmul.f32.gmra.mxu0 %v506
        %v581 = vpop.f32.mrf.mxu0
        %v582 = vadd.f32 0.0, %v581
        %583 = vdwg.mxu0
        %584 = vxpose.xlu0.b32.start [1/16] %v573, 128
        %585 = vxpose.xlu0.b32.cont [2/16] %v576, 128
        %586 = vxpose.xlu0.b32.cont [3/16] %v579, 128
        %587 = vxpose.xlu0.b32.cont [4/16] %v582, 128
        %588 = vxpose.xlu0.b32.cont [5/16] 0.0, 128
        %589 = vxpose.xlu0.b32.cont [6/16] 0.0, 128
        %590 = vxpose.xlu0.b32.cont [7/16] 0.0, 128
        %591 = vxpose.xlu0.b32.cont [8/16] 0.0, 128
        %592 = vxpose.xlu0.b32.cont [9/16] 0.0, 128
        %593 = vxpose.xlu0.b32.cont [10/16] 0.0, 128
        %594 = vxpose.xlu0.b32.cont [11/16] 0.0, 128
        %595 = vxpose.xlu0.b32.cont [12/16] 0.0, 128
        %596 = vxpose.xlu0.b32.cont [13/16] 0.0, 128
        %597 = vxpose.xlu0.b32.cont [14/16] 0.0, 128
        %598 = vxpose.xlu0.b32.cont [15/16] 0.0, 128
        %599 = vxpose.xlu0.b32.end [16/16] 0.0, 128
        %v600 = vpop.trf.xlu0
        %v601 = vpop.trf.xlu0
        %v602 = vpop.trf.xlu0
        %v603 = vpop.trf.xlu0
        %v604 = vpop.trf.xlu0
        %v605 = vpop.trf.xlu0
        %v606 = vpop.trf.xlu0
        %v607 = vpop.trf.xlu0
        %v608 = vpop.trf.xlu0
        %v609 = vpop.trf.xlu0
        %v610 = vpop.trf.xlu0
        %v611 = vpop.trf.xlu0
        %v612 = vpop.trf.xlu0
        %v613 = vpop.trf.xlu0
        %v614 = vpop.trf.xlu0
        %v615 = vpop.trf.xlu0
        %s616 = scalar_lea.vmem %s252, 64 [#allocation2]
        %v617 = vld [vmem:[%s616] sm:$0xff]
        %v618 = vld [vmem:[%s616 + $0x8] sm:$0xff]
        %v619 = vld [vmem:[%s616 + $0x10] sm:$0xff]
        %v620 = vld [vmem:[%s616 + $0x18] sm:$0xff]
        %v621 = vrot.slane %v383, 4
        %v622 = vsel %vm333, %v621, 0
        %624 = vmatpush.msra.mxu0 0.0
        %625 = vmatpush.msra.mxu0 0.0
        %626 = vmatpush.msra.mxu0 0.0
        %627 = vmatpush.msra.mxu0 0.0
        %628 = vmatpush.msra.mxu0 0.0
        %629 = vmatpush.msra.mxu0 0.0
        %630 = vmatpush.msra.mxu0 0.0
        %631 = vmatpush.msra.mxu0 0.0
        %632 = vmatpush.msra.mxu0 0.0
        %633 = vmatpush.msra.mxu0 0.0
        %634 = vmatpush.msra.mxu0 0.0
        %635 = vmatpush.msra.mxu0 0.0
        %636 = vmatpush.msra.mxu0 %v620
        %637 = vmatpush.msra.mxu0 %v619
        %638 = vmatpush.msra.mxu0 %v618
        %639 = vmatpush.msra.mxu0 %v617
        %640 = vmatmul.f32.gmra.mxu0 %v622
        %v641 = vpop.f32.mrf.mxu0
        %v642 = vadd.f32 0.0, %v641
        %643 = vdwg.mxu0
        %v644 = vsel %vm414, %v642, -1e+30
        %v645 = vsel %vm416, %v644, -inf
        %646 = vmax.xlane.f32.xlu0 %v645
        %v647 = vpop.xlane.xlu0 %646
        %v648 = vsub.f32 %v644, %v647
        %v649 = vmul.f32 %v648, 1.442695
        %v650 = vpow.pop %v649
        %v651 = vsel %vm416, %v650, 0.0
        %652 = vadd.xlane.f32.xlu0 %v651
        %v653 = vpop.xlane.xlu0 %652
        %v654 = vrcp.pop %v653
        %v655 = vmul.f32 %v653, %v654
        %v656 = vsub.f32 1.0, %v655
        %v657 = vmul.f32 %v654, %v656
        %v658 = vadd.f32 %v654, %v657
        %vm659 = vweird.f32 %v653
        %vm660 = vweird.f32 %v654
        %vm661 = vmor %vm659, %vm660
        %v662 = vsel %vm661, %v654, %v658
        %v663 = vand.u32 2147483647, %v653
        %vm664 = vcmp.eq.f32.partialorder %v663, 8.507059e+37
        %v665 = vand.u32 %v653, 2147483648
        %v666 = vor.u32 1.1754944e-38, %v665
        %v667 = vsel %vm664, %v666, %v662
        %v668 = vmul.f32 %v650, %v667
        %669 = vmatpush.xpose.msra.mxu0 0.0
        %670 = vmatpush.xpose.msra.mxu0 0.0
        %671 = vmatpush.xpose.msra.mxu0 0.0
        %672 = vmatpush.xpose.msra.mxu0 0.0
        %673 = vmatpush.xpose.msra.mxu0 0.0
        %674 = vmatpush.xpose.msra.mxu0 0.0
        %675 = vmatpush.xpose.msra.mxu0 0.0
        %676 = vmatpush.xpose.msra.mxu0 0.0
        %677 = vmatpush.xpose.msra.mxu0 0.0
        %678 = vmatpush.xpose.msra.mxu0 0.0
        %679 = vmatpush.xpose.msra.mxu0 0.0
        %680 = vmatpush.xpose.msra.mxu0 0.0
        %681 = vmatpush.xpose.msra.mxu0 0.0
        %682 = vmatpush.xpose.msra.mxu0 0.0
        %683 = vmatpush.xpose.msra.mxu0 0.0
        %684 = vmatpush.xpose.msra.mxu0 %v668
        %685 = vmatmul.f32.gmra.mxu0 %v617
        %v686 = vpop.f32.mrf.mxu0
        %v687 = vadd.f32 0.0, %v686
        %688 = vmatmul.f32.gmra.mxu0 %v618
        %v689 = vpop.f32.mrf.mxu0
        %v690 = vadd.f32 0.0, %v689
        %691 = vmatmul.f32.gmra.mxu0 %v619
        %v692 = vpop.f32.mrf.mxu0
        %v693 = vadd.f32 0.0, %v692
        %694 = vmatmul.f32.gmra.mxu0 %v620
        %v695 = vpop.f32.mrf.mxu0
        %v696 = vadd.f32 0.0, %v695
        %697 = vdwg.mxu0
        %698 = vxpose.xlu0.b32.start [1/16] %v687, 128
        %699 = vxpose.xlu0.b32.cont [2/16] %v690, 128
        %700 = vxpose.xlu0.b32.cont [3/16] %v693, 128
        %701 = vxpose.xlu0.b32.cont [4/16] %v696, 128
        %702 = vxpose.xlu0.b32.cont [5/16] 0.0, 128
        %703 = vxpose.xlu0.b32.cont [6/16] 0.0, 128
        %704 = vxpose.xlu0.b32.cont [7/16] 0.0, 128
        %705 = vxpose.xlu0.b32.cont [8/16] 0.0, 128
        %706 = vxpose.xlu0.b32.cont [9/16] 0.0, 128
        %707 = vxpose.xlu0.b32.cont [10/16] 0.0, 128
        %708 = vxpose.xlu0.b32.cont [11/16] 0.0, 128
        %709 = vxpose.xlu0.b32.cont [12/16] 0.0, 128
        %710 = vxpose.xlu0.b32.cont [13/16] 0.0, 128
        %711 = vxpose.xlu0.b32.cont [14/16] 0.0, 128
        %712 = vxpose.xlu0.b32.cont [15/16] 0.0, 128
        %713 = vxpose.xlu0.b32.end [16/16] 0.0, 128
        %v714 = vpop.trf.xlu0
        %v715 = vpop.trf.xlu0
        %v716 = vpop.trf.xlu0
        %v717 = vpop.trf.xlu0
        %v718 = vpop.trf.xlu0
        %v719 = vpop.trf.xlu0
        %v720 = vpop.trf.xlu0
        %v721 = vpop.trf.xlu0
        %v722 = vpop.trf.xlu0
        %v723 = vpop.trf.xlu0
        %v724 = vpop.trf.xlu0
        %v725 = vpop.trf.xlu0
        %v726 = vpop.trf.xlu0
        %v727 = vpop.trf.xlu0
        %v728 = vpop.trf.xlu0
        %v729 = vpop.trf.xlu0
        %s730 = scalar_lea.vmem %s252, 96 [#allocation2]
        %v731 = vld [vmem:[%s730] sm:$0xff]
        %v732 = vld [vmem:[%s730 + $0x8] sm:$0xff]
        %v733 = vld [vmem:[%s730 + $0x10] sm:$0xff]
        %v734 = vld [vmem:[%s730 + $0x18] sm:$0xff]
        %v735 = vrot.slane %v383, 6
        %v736 = vsel %vm333, %v735, 0
        %738 = vmatpush.msra.mxu0 0.0
        %739 = vmatpush.msra.mxu0 0.0
        %740 = vmatpush.msra.mxu0 0.0
        %741 = vmatpush.msra.mxu0 0.0
        %742 = vmatpush.msra.mxu0 0.0
        %743 = vmatpush.msra.mxu0 0.0
        %744 = vmatpush.msra.mxu0 0.0
        %745 = vmatpush.msra.mxu0 0.0
        %746 = vmatpush.msra.mxu0 0.0
        %747 = vmatpush.msra.mxu0 0.0
        %748 = vmatpush.msra.mxu0 0.0
        %749 = vmatpush.msra.mxu0 0.0
        %750 = vmatpush.msra.mxu0 %v734
        %751 = vmatpush.msra.mxu0 %v733
        %752 = vmatpush.msra.mxu0 %v732
        %753 = vmatpush.msra.mxu0 %v731
        %754 = vmatmul.f32.gmra.mxu0 %v736
        %v755 = vpop.f32.mrf.mxu0
        %v756 = vadd.f32 0.0, %v755
        %757 = vdwg.mxu0
        %v758 = vsel %vm414, %v756, -1e+30
        %v759 = vsel %vm416, %v758, -inf
        %760 = vmax.xlane.f32.xlu0 %v759
        %v761 = vpop.xlane.xlu0 %760
        %v762 = vsub.f32 %v758, %v761
        %v763 = vmul.f32 %v762, 1.442695
        %v764 = vpow.pop %v763
        %v765 = vsel %vm416, %v764, 0.0
        %766 = vadd.xlane.f32.xlu0 %v765
        %v767 = vpop.xlane.xlu0 %766
        %v768 = vrcp.pop %v767
        %v769 = vmul.f32 %v767, %v768
        %v770 = vsub.f32 1.0, %v769
        %v771 = vmul.f32 %v768, %v770
        %v772 = vadd.f32 %v768, %v771
        %vm773 = vweird.f32 %v767
        %vm774 = vweird.f32 %v768
        %vm775 = vmor %vm773, %vm774
        %v776 = vsel %vm775, %v768, %v772
        %v777 = vand.u32 2147483647, %v767
        %vm778 = vcmp.eq.f32.partialorder %v777, 8.507059e+37
        %v779 = vand.u32 %v767, 2147483648
        %v780 = vor.u32 1.1754944e-38, %v779
        %v781 = vsel %vm778, %v780, %v776
        %v782 = vmul.f32 %v764, %v781
        %783 = vmatpush.xpose.msra.mxu0 0.0
        %784 = vmatpush.xpose.msra.mxu0 0.0
        %785 = vmatpush.xpose.msra.mxu0 0.0
        %786 = vmatpush.xpose.msra.mxu0 0.0
        %787 = vmatpush.xpose.msra.mxu0 0.0
        %788 = vmatpush.xpose.msra.mxu0 0.0
        %789 = vmatpush.xpose.msra.mxu0 0.0
        %790 = vmatpush.xpose.msra.mxu0 0.0
        %791 = vmatpush.xpose.msra.mxu0 0.0
        %792 = vmatpush.xpose.msra.mxu0 0.0
        %793 = vmatpush.xpose.msra.mxu0 0.0
        %794 = vmatpush.xpose.msra.mxu0 0.0
        %795 = vmatpush.xpose.msra.mxu0 0.0
        %796 = vmatpush.xpose.msra.mxu0 0.0
        %797 = vmatpush.xpose.msra.mxu0 0.0
        %798 = vmatpush.xpose.msra.mxu0 %v782
        %799 = vmatmul.f32.gmra.mxu0 %v731
        %v800 = vpop.f32.mrf.mxu0
        %v801 = vadd.f32 0.0, %v800
        %802 = vmatmul.f32.gmra.mxu0 %v732
        %v803 = vpop.f32.mrf.mxu0
        %v804 = vadd.f32 0.0, %v803
        %805 = vmatmul.f32.gmra.mxu0 %v733
        %v806 = vpop.f32.mrf.mxu0
        %v807 = vadd.f32 0.0, %v806
        %808 = vmatmul.f32.gmra.mxu0 %v734
        %v809 = vpop.f32.mrf.mxu0
        %v810 = vadd.f32 0.0, %v809
        %811 = vdwg.mxu0
        %812 = vxpose.xlu0.b32.start [1/16] %v801, 128
        %813 = vxpose.xlu0.b32.cont [2/16] %v804, 128
        %814 = vxpose.xlu0.b32.cont [3/16] %v807, 128
        %815 = vxpose.xlu0.b32.cont [4/16] %v810, 128
        %816 = vxpose.xlu0.b32.cont [5/16] 0.0, 128
        %817 = vxpose.xlu0.b32.cont [6/16] 0.0, 128
        %818 = vxpose.xlu0.b32.cont [7/16] 0.0, 128
        %819 = vxpose.xlu0.b32.cont [8/16] 0.0, 128
        %820 = vxpose.xlu0.b32.cont [9/16] 0.0, 128
        %821 = vxpose.xlu0.b32.cont [10/16] 0.0, 128
        %822 = vxpose.xlu0.b32.cont [11/16] 0.0, 128
        %823 = vxpose.xlu0.b32.cont [12/16] 0.0, 128
        %824 = vxpose.xlu0.b32.cont [13/16] 0.0, 128
        %825 = vxpose.xlu0.b32.cont [14/16] 0.0, 128
        %826 = vxpose.xlu0.b32.cont [15/16] 0.0, 128
        %827 = vxpose.xlu0.b32.end [16/16] 0.0, 128
        %v828 = vpop.trf.xlu0
        %v829 = vpop.trf.xlu0
        %v830 = vpop.trf.xlu0
        %v831 = vpop.trf.xlu0
        %v832 = vpop.trf.xlu0
        %v833 = vpop.trf.xlu0
        %v834 = vpop.trf.xlu0
        %v835 = vpop.trf.xlu0
        %v836 = vpop.trf.xlu0
        %v837 = vpop.trf.xlu0
        %v838 = vpop.trf.xlu0
        %v839 = vpop.trf.xlu0
        %v840 = vpop.trf.xlu0
        %v841 = vpop.trf.xlu0
        %v842 = vpop.trf.xlu0
        %v843 = vpop.trf.xlu0
        %v845 = vrot.slane %v600, 6
        %v848 = vrot.slane %v714, 4
        %v851 = vrot.slane %v828, 2
        %v853 = vsel %vm416, %v486, %v845
        %vm854 = vcmask 1043456
        %v855 = vsel %vm854, %v853, %v848
        %vm856 = vcmask 1045504
        %v857 = vsel %vm856, %v855, %v851
        %v858 = vld [vmem:[%s5] sm:$0xff]
        %v859 = vld [vmem:[%s5 + $0x8] sm:$0xff]
        %v860 = vld [vmem:[%s5 + $0x10] sm:$0xff]
        %v861 = vld [vmem:[%s5 + $0x18] sm:$0xff]
        %v863 = vsel %vm333, %v857, 0
        %865 = vmatpush.msra.mxu0 0.0
        %866 = vmatpush.msra.mxu0 0.0
        %867 = vmatpush.msra.mxu0 0.0
        %868 = vmatpush.msra.mxu0 0.0
        %869 = vmatpush.msra.mxu0 0.0
        %870 = vmatpush.msra.mxu0 0.0
        %871 = vmatpush.msra.mxu0 0.0
        %872 = vmatpush.msra.mxu0 0.0
        %873 = vmatpush.msra.mxu0 0.0
        %874 = vmatpush.msra.mxu0 0.0
        %875 = vmatpush.msra.mxu0 0.0
        %876 = vmatpush.msra.mxu0 0.0
        %877 = vmatpush.msra.mxu0 %v861
        %878 = vmatpush.msra.mxu0 %v860
        %879 = vmatpush.msra.mxu0 %v859
        %880 = vmatpush.msra.mxu0 %v858
        %881 = vmatmul.f32.gmra.mxu0 %v863
        %v882 = vpop.f32.mrf.mxu0
        %v883 = vadd.f32 0.0, %v882
        %884 = vdwg.mxu0
        %885 = vst [vmem:[%s285] sm:$0xff] %v883
        %s886 = sand.u32 %s167, 1
        %s887 = scalar_lea.sflag [#allocation4], %s886
        %s888 = sand.u32 %s167, 1
        %s889 = smul.addr %s888, 8
        %s890 = scalar_lea.vmem [#allocation5], %s889
        // Predicated region
        $region49: #{tpu_custom_call.1} parent=43 // pred_check
          %p891 = pneg %p177
        $region50: #{tpu_custom_call.1} parent=43 // pred_check_branch
          %893 = sbr.rel (%p891) target = $region52
        $region51: #{tpu_custom_call.1} parent=43 // pred_region
          %895 = vsyncadd %s887, 0
          %s896 = smul.addr %s23, 8
          %s897 = scalar_lea.hbm %s6, %s896
          %s899 = sshll.u32 %s890, 4
          %s900 = int_to_ptr.vmem [resolvable:$true] %s899
          %s901 = sshll.u32 %s897, 4
          %s902 = int_to_ptr.hbm [resolvable:$true] %s901
          %904 = dma.vmem_to_hbm [thread:$0]  %s900, 128, %s902, %s887
        $region52: #{tpu_custom_call.1} parent=43 // pred_fallthru
          _
      $region44: #{tpu_custom_call.1} parent=5 // pred_fallthru
        _
      %p905 = scmp.le.s32.totalorder 2, %s18
      // Predicated region
      $region53: #{tpu_custom_call.1} parent=5 // pred_check
        %p906 = pneg %p905
      $region54: #{tpu_custom_call.1} parent=5 // pred_check_branch
        %908 = sbr.rel (%p906) target = $region56
      $region55: #{tpu_custom_call.1} parent=5 // pred_region
        %s909 = ssub.s32 %s18, 2
        // Predicated region
        $region57: #{tpu_custom_call.1} parent=55 // pred_check
          %p910 = pneg %p183
        $region58: #{tpu_custom_call.1} parent=55 // pred_check_branch
          %912 = sbr.rel (%p910) target = $region60
        $region59: #{tpu_custom_call.1} parent=55 // pred_region
          %s913 = sand.u32 %s168, 1
          %s914 = scalar_lea.sflag [#allocation4], %s913
          %s915 = sand.u32 %s168, 1
          %s916 = smul.addr %s915, 8
          %s917 = scalar_lea.vmem [#allocation5], %s916
          %919 = dma.done %s914, 128
        $region60: #{tpu_custom_call.1} parent=55 // pred_fallthru
          _
      $region56: #{tpu_custom_call.1} parent=5 // pred_fallthru
        _
    $region6: #{tpu_custom_call.1} parent=1 // loop_footer
      %s22 = sadd.s32 1, %s18
    $region7: #{tpu_custom_call.1} parent=1 // loop_footer_branch
      %17 = sbr.rel target = $region3
    $region8: #{tpu_custom_call.1} parent=1 // loop_exit
      _
    %920 = vsyncpa [#allocation3], 1
    %s921 = scalar_lea.sflag [#allocation3], 1
    %922 = vsyncpa %s921, 1
    %923 = vsyncpa [#allocation4], 1
    %s924 = scalar_lea.sflag [#allocation4], 1
    %925 = vsyncpa %s924, 1

</llo_original>
